<compile_context>
chip_gen: v5e
topology: v5e:2x2
jax: 0.10.0
libtpu: 0.0.40
codegen_flags: <defaults>
</compile_context>

<pallas_src>
import numpy as np
import jax
import jax.numpy as jnp
from jax.experimental import pallas as pl
from jax.experimental.pallas import tpu as pltpu


def _round_up(x, m):
    return -(-x // m) * m


def _vmem_capacity_bytes():
    # Trace-time HW query; fall back to the smallest per-TC VMEM (v7x, 64 MiB)
    # so sizing stays safe when the query is unavailable.
    try:
        return int(pltpu.get_tpu_info().vmem_capacity_bytes)
    except Exception:
        return 64 << 20


def _ce_kernel(logits_ref, target_ref, wrow_ref, out_ref):
    # TODO(synk): on v7x the single EUP (f32 exp) becomes the binding slot
    # before the 3.2 TB/s HBM does; a bf16 exp path (f32 row-sum accumulate)
    # would roughly double throughput there.  f32 kept for accuracy + v5e.
    x = logits_ref[...].astype(jnp.float32)           # (TN, C) f32 compute
    tgt = target_ref[...]                              # (TN, 1) int32
    w = wrow_ref[...]                                  # (TN, 1) f32 (0 on padded rows)

    # Boolean one-hot of the target class (padded rows have tgt = -1 -> never match).
    classes = jax.lax.broadcasted_iota(jnp.int32, x.shape, 1)
    onehot = classes == tgt                            # (TN, C) bool

    # Numerically stable log-sum-exp per row.
    m = jnp.max(x, axis=-1, keepdims=True)             # (TN, 1)
    lse = m + jnp.log(jnp.sum(jnp.exp(x - m), axis=-1, keepdims=True))

    # Target logit via masked row-sum (no float one-hot multiplies).
    x_t = jnp.sum(jnp.where(onehot, x, 0.0), axis=-1, keepdims=True)

    # Per-tile partial sum of w[t_i] * nll_i; weight gather done in the wrapper.
    tile_sum = jnp.sum(w * (lse - x_t))                 # scalar

    # Lane-dense, fully (8,128)-aligned writeback: scalar broadcast over the block.
    out_ref[...] = jnp.broadcast_to(tile_sum, (8, 128))


def _pick_tile_n(n, c, itemsize, vmem_cap):
    """Largest sublane-aligned batch tile whose working set (double-buffered
    lane-padded logits tile + f32 temporaries + side inputs) fits ~45% of VMEM."""
    c_pad = _round_up(c, 128)                          # lane padding of the class dim
    sub = max(8, 8 * (4 // max(itemsize, 1)))          # sublane packing: f32->8, bf16->16, i8->32
    budget = int(vmem_cap * 0.45)
    per_row = (c_pad * (2 * itemsize + 3 * 4)          # 2x input buffers + ~3 f32-wide temps
               + 4 * 512)                              # lane-padded (row,1) target/weight, 2x buffered
    t = max(sub, (budget // per_row) // sub * sub)
    return min(t, _round_up(n, sub))


def cross_entropy_loss(logits, target, per_cls_weights=None, *, tile_n=None):
    """F.cross_entropy(logits, target, weight=per_cls_weights), mean reduction."""
    N, C = logits.shape
    itemsize = jnp.dtype(logits.dtype).itemsize
    vmem_cap = _vmem_capacity_bytes()

    if tile_n is None:
        tile_n = _pick_tile_n(N, C, itemsize, vmem_cap)

    # Per-sample class weight: plain-JAX gather hoisted out of the kernel.
    if per_cls_weights is None:
        w_row = jnp.ones((N,), dtype=jnp.float32)
    else:
        w_row = jnp.asarray(per_cls_weights, dtype=jnp.float32)[target]
    denom = jnp.sum(w_row)                              # sum_i w[t_i]

    # Pad the batch to a tile multiple; padded rows get target = -1 and weight 0.
    n_pad = pl.cdiv(N, tile_n) * tile_n
    num_tiles = n_pad // tile_n
    tgt2d = target.astype(jnp.int32).reshape(N, 1)
    w2d = w_row.reshape(N, 1)
    if n_pad != N:
        logits = jnp.pad(logits, ((0, n_pad - N), (0, 0)))
        tgt2d = jnp.pad(tgt2d, ((0, n_pad - N), (0, 0)), constant_values=-1)
        w2d = jnp.pad(w2d, ((0, n_pad - N), (0, 0)))

    # Explicit scoped-VMEM budget with tile-scaled headroom (lane-aware).
    c_pad = _round_up(C, 128)
    working = tile_n * (c_pad * (2 * itemsize + 3 * 4) + 4 * 512) + 2 * 8 * 128 * 4
    vmem_limit = int(min(vmem_cap, max(working + (8 << 20), 32 << 20)))

    cost = pl.CostEstimate(
        flops=6 * N * C,
        transcendentals=N * C,
        bytes_accessed=N * C * itemsize + N * 8 + num_tiles * 8 * 128 * 4,
    )

    wpart = pl.pallas_call(
        _ce_kernel,
        out_shape=jax.ShapeDtypeStruct((8 * num_tiles, 128), jnp.float32),
        grid=(num_tiles,),
        in_specs=[
            pl.BlockSpec((tile_n, C), lambda i: (i, 0)),   # streaming logits tile
            pl.BlockSpec((tile_n, 1), lambda i: (i, 0)),   # targets
            pl.BlockSpec((tile_n, 1), lambda i: (i, 0)),   # per-sample weights
        ],
        out_specs=pl.BlockSpec((8, 128), lambda i: (i, 0)),
        compiler_params=pltpu.CompilerParams(
            # TODO(synk): on v7x verify the batch axis splits across both
            # TensorCores; if not, switch to pltpu.CORE_PARALLEL here.
            dimension_semantics=("parallel",),
            vmem_limit_bytes=vmem_limit,
        ),
        cost_estimate=cost,
    )(logits, tgt2d, w2d)

    # Each (8,128) block carries one tile's partial sum broadcast over lanes.
    return jnp.sum(wpart[::8, 0]) / denom


def make_per_cls_weights(cls_num_list):
    """Deterministic reproduction of the module's reweight_CE branch."""
    beta = 0.9999
    effective_num = 1.0 - np.power(beta, np.asarray(cls_num_list, dtype=np.float64))
    per_cls_weights = (1.0 - beta) / effective_num
    per_cls_weights = per_cls_weights / np.sum(per_cls_weights) * len(cls_num_list)
    return jnp.asarray(per_cls_weights, dtype=jnp.float32)


def _reference(logits, target, weight=None):
    # Pure-JAX reference for sanity checking.
    logp = jax.nn.log_softmax(logits.astype(jnp.float32), axis=-1)
    nll = -jnp.take_along_axis(logp, target.reshape(-1, 1), axis=-1)[:, 0]
    if weight is None:
        return jnp.mean(nll)
    w = weight[target]
    return jnp.sum(w * nll) / jnp.sum(w)


if __name__ == "__main__":
    key = jax.random.PRNGKey(0)
    N, C = 16, 8
    k1, k2 = jax.random.split(key)
    logits = jax.random.normal(k1, (N, C), dtype=jnp.float32)
    target = jax.random.randint(k2, (N,), 0, C, dtype=jnp.int32)

    # Unweighted path (reweight_CE=False).
    loss_plain = cross_entropy_loss(logits, target, None)
    jax.block_until_ready(loss_plain)
    ref_plain = _reference(logits, target, None)
    assert jnp.allclose(loss_plain, ref_plain, atol=1e-5, rtol=1e-5), (loss_plain, ref_plain)

    # Reweighted path (reweight_CE=True) with a synthetic class-count list.
    cls_num_list = [1000, 500, 250, 125, 60, 30, 15, 8]
    w = make_per_cls_weights(cls_num_list)
    loss_w = cross_entropy_loss(logits, target, w)
    jax.block_until_ready(loss_w)
    ref_w = _reference(logits, target, w)
    assert jnp.allclose(loss_w, ref_w, atol=1e-5, rtol=1e-5), (loss_w, ref_w)

    # Ragged batch (exercises the padding / sentinel path: N not a tile multiple).
    N2 = 13
    loss_r = cross_entropy_loss(logits[:N2], target[:N2], w)
    jax.block_until_ready(loss_r)
    ref_r = _reference(logits[:N2], target[:N2], w)
    assert jnp.allclose(loss_r, ref_r, atol=1e-5, rtol=1e-5), (loss_r, ref_r)

    # bf16 logits streamed straight through HBM (kernel casts to f32 internally).
    logits_bf = logits.astype(jnp.bfloat16)
    loss_bf = cross_entropy_loss(logits_bf, target, w)
    jax.block_until_ready(loss_bf)
    ref_bf = _reference(logits_bf, target, w)
    assert jnp.allclose(loss_bf, ref_bf, atol=1e-4, rtol=1e-4), (loss_bf, ref_bf)

    print("KERNEL_OK")
</pallas_src>

<mosaic_0001>
module attributes {stable_mosaic.version = 11 : i64} {
  func.func @_ce_kernel(%arg0: i32, %arg1: memref<16x8xf32, #tpu.memory_space<vmem>>, %arg2: memref<16x1xi32, #tpu.memory_space<vmem>>, %arg3: memref<16x1xf32, #tpu.memory_space<vmem>>, %arg4: memref<8x128xf32, #tpu.memory_space<vmem>>) attributes {dimension_semantics = [#tpu.dimension_semantics<parallel>], iteration_bounds = array<i64: 1>, scalar_prefetch = 0 : i64, scratch_operands = 0 : i64, tpu.core_type = #tpu.core_type<tc>, window_params = [{transform_indices = @transform_0, window_bounds = array<i64: 16, 8>}, {transform_indices = @transform_1, window_bounds = array<i64: 16, 1>}, {transform_indices = @transform_2, window_bounds = array<i64: 16, 1>}, {transform_indices = @transform_3, window_bounds = array<i64: 8, 128>}]} {
    %c0 = arith.constant 0 : index
    %c0_0 = arith.constant 0 : index
    %0 = vector.load %arg1[%c0, %c0_0] : memref<16x8xf32, #tpu.memory_space<vmem>>, vector<16x8xf32>
    %c0_1 = arith.constant 0 : index
    %c0_2 = arith.constant 0 : index
    %1 = vector.load %arg2[%c0_1, %c0_2] : memref<16x1xi32, #tpu.memory_space<vmem>>, vector<16x1xi32>
    %c0_3 = arith.constant 0 : index
    %c0_4 = arith.constant 0 : index
    %2 = vector.load %arg3[%c0_3, %c0_4] : memref<16x1xf32, #tpu.memory_space<vmem>>, vector<16x1xf32>
    %3 = tpu.iota {dimensions = array<i32: 1>} : vector<16x8xi32>
    %4 = vector.broadcast %1 : vector<16x1xi32> to vector<16x8xi32>
    %5 = arith.cmpi eq, %3, %4 : vector<16x8xi32>
    %cst = arith.constant dense<0xFF800000> : vector<16xf32>
    %6 = vector.multi_reduction <maximumf>, %0, %cst [1] : vector<16x8xf32> to vector<16xf32>
    %7 = vector.shape_cast %6 : vector<16xf32> to vector<16x1xf32>
    %8 = vector.broadcast %7 : vector<16x1xf32> to vector<16x8xf32>
    %9 = arith.subf %0, %8 : vector<16x8xf32>
    %10 = math.exp %9 : vector<16x8xf32>
    %cst_5 = arith.constant dense<0.000000e+00> : vector<16xf32>
    %11 = vector.multi_reduction <add>, %10, %cst_5 [1] : vector<16x8xf32> to vector<16xf32>
    %12 = vector.shape_cast %11 : vector<16xf32> to vector<16x1xf32>
    %13 = math.log %12 : vector<16x1xf32>
    %14 = arith.addf %7, %13 : vector<16x1xf32>
    %cst_6 = arith.constant 0.000000e+00 : f32
    %15 = vector.broadcast %cst_6 : f32 to vector<16x8xf32>
    %16 = arith.select %5, %0, %15 : vector<16x8xi1>, vector<16x8xf32>
    %cst_7 = arith.constant dense<0.000000e+00> : vector<16xf32>
    %17 = vector.multi_reduction <add>, %16, %cst_7 [1] : vector<16x8xf32> to vector<16xf32>
    %18 = vector.shape_cast %17 : vector<16xf32> to vector<16x1xf32>
    %19 = arith.subf %14, %18 : vector<16x1xf32>
    %20 = arith.mulf %2, %19 : vector<16x1xf32>
    %21 = vector.shape_cast %20 : vector<16x1xf32> to vector<1x16x1xf32>
    %cst_8 = arith.constant dense<0.000000e+00> : vector<1xf32>
    %22 = vector.multi_reduction <add>, %21, %cst_8 [1, 2] : vector<1x16x1xf32> to vector<1xf32>
    %23 = vector.shape_cast %22 : vector<1xf32> to vector<1x1x1xf32>
    %24 = vector.extract %23[0, 0, 0] : f32 from vector<1x1x1xf32>
    %25 = vector.broadcast %24 : f32 to vector<8x128xf32>
    %c0_9 = arith.constant 0 : index
    %c0_10 = arith.constant 0 : index
    %26 = vector.load %arg4[%c0_9, %c0_10] : memref<8x128xf32, #tpu.memory_space<vmem>>, vector<8x128xf32>
    tpu.vector_store %arg4[%c0_9, %c0_10], %25 {strides = array<i32>} : memref<8x128xf32, #tpu.memory_space<vmem>>, vector<8x128xf32>,
    return
  }
  func.func @transform_0(%arg0: i32) -> (i32, i32) {
    %c0_i32 = arith.constant 0 : i32
    %c0_i32_0 = arith.constant 0 : i32
    return %arg0, %c0_i32 : i32, i32
  }
  func.func @transform_1(%arg0: i32) -> (i32, i32) {
    %c0_i32 = arith.constant 0 : i32
    %c0_i32_0 = arith.constant 0 : i32
    return %arg0, %c0_i32 : i32, i32
  }
  func.func @transform_2(%arg0: i32) -> (i32, i32) {
    %c0_i32 = arith.constant 0 : i32
    %c0_i32_0 = arith.constant 0 : i32
    return %arg0, %c0_i32 : i32, i32
  }
  func.func @transform_3(%arg0: i32) -> (i32, i32) {
    %c0_i32 = arith.constant 0 : i32
    %c0_i32_0 = arith.constant 0 : i32
    return %arg0, %c0_i32 : i32, i32
  }
}

</mosaic_0001>

<llo_original>
// kernel: tpu_custom_call.1
$region0: #{tpu_custom_call.1}
  #allocation0 [shape = 'u32[]', space=smem, size = 0x4, offset = 0x4, fixed_abs, tag = 'smem constant byte address 0x4 - core index']
  #allocation1 [shape = 'u32[72,128]{1,0:T(1,128)}', space=vmem, size = 0x9000, scoped, tag = 'internal scratch']
  %s0 = inlined_call_operand.vmem [shape: f32[16,8], index: 0, kind: input, shape index: {}]
  %s1 = inlined_call_operand.vmem [shape: s32[16,1], index: 1, kind: input, shape index: {}]
  %s2 = inlined_call_operand.vmem [shape: f32[16,1], index: 2, kind: input, shape index: {}]
  %s3 = inlined_call_operand.hbm [shape: f32[8,128], index: 3, kind: output, shape index: {}]
  %s4 = sld [smem:[#allocation0]]
  $region22: #{tpu_custom_call.1} parent=0
    _
  %s6 = ssub.s32 1, %s4
  %s7 = scalar_select 0, %s6, %s4
  $region1: #{tpu_custom_call.1} parent=0
    #allocation2 [shape = 'u8[4096]{0}', space=vmem, size = 0x1000, scoped, tag = 'output window, operand 0, single buffered']
    #allocation3 [shape = 's32[1]{0}', space=sflag, size = 0x4, scoped, tag = 'scoped memory for tpu_custom_call.1']
    %8 = vsyncpa [#allocation3], 0
    // Predicated region
    $region2: #{tpu_custom_call.1} parent=1 // pred_check
      _
    $region3: #{tpu_custom_call.1} parent=1 // pred_check_branch
      %10 = sbr.rel (0) target = $region5
    $region4: #{tpu_custom_call.1} parent=1 // pred_region
      _
    $region5: #{tpu_custom_call.1} parent=1 // pred_fallthru
      _
    // Predicated region
    $region6: #{tpu_custom_call.1} parent=1 // pred_check
      _
    $region7: #{tpu_custom_call.1} parent=1 // pred_check_branch
      %12 = sbr.rel (0) target = $region9
    $region8: #{tpu_custom_call.1} parent=1 // pred_region
      _
    $region9: #{tpu_custom_call.1} parent=1 // pred_fallthru
      _
    // Predicated region
    $region10: #{tpu_custom_call.1} parent=1 // pred_check
      _
    $region11: #{tpu_custom_call.1} parent=1 // pred_check_branch
      %14 = sbr.rel (0) target = $region13
    $region12: #{tpu_custom_call.1} parent=1 // pred_region
      _
    $region13: #{tpu_custom_call.1} parent=1 // pred_fallthru
      _
    %v15 = vld [vmem:[%s0] sm:$0xff]
    %v16 = vld [vmem:[%s0 + $0x8] sm:$0xff]
    %v17 = vld [vmem:[%s1] sm:$0xff]
    %v18 = vld [vmem:[%s1 + $0x8] sm:$0xff]
    %v19 = vld [vmem:[%s2] sm:$0xff]
    %v20 = vld [vmem:[%s2 + $0x8] sm:$0xff]
    %v21 = vlaneseq
    %v22 = vand.u32 %v21, 127
    %23 = vset.pattern.permute.xlu0 0
    %24 = vperm.xlu0 %23, %v17
    %v25 = vpop.permute.xlu0 %24
    %26 = vset.pattern.permute.xlu0 0
    %27 = vperm.xlu0 %26, %v18
    %v28 = vpop.permute.xlu0 %27
    %vm29 = vcmp.eq.s32.totalorder %v22, %v25
    %vm30 = vcmp.eq.s32.totalorder %v22, %v28
    %vm31 = vcmask 64512
    %v32 = vsel %vm31, %v15, -inf
    %33 = vmax.xlane.f32.xlu0 %v32
    %v34 = vpop.xlane.xlu0 %33
    %v35 = vsel %vm31, %v16, -inf
    %36 = vmax.xlane.f32.xlu0 %v35
    %v37 = vpop.xlane.xlu0 %36
    %v38 = vsub.f32 %v15, %v34
    %v39 = vsub.f32 %v16, %v37
    %v40 = vmul.f32 %v38, 1.442695
    %v41 = vpow.pop %v40
    %v42 = vmul.f32 %v39, 1.442695
    %v43 = vpow.pop %v42
    %v44 = vsel %vm31, %v41, 0.0
    %45 = vadd.xlane.f32.xlu0 %v44
    %v46 = vpop.xlane.xlu0 %45
    %v47 = vsel %vm31, %v43, 0.0
    %48 = vadd.xlane.f32.xlu0 %v47
    %v49 = vpop.xlane.xlu0 %48
    %v50 = vlog2.pop %v46
    %v51 = vmul.f32 %v50, 0.6931472
    %v52 = vlog2.pop %v49
    %v53 = vmul.f32 %v52, 0.6931472
    %v54 = vadd.f32 %v34, %v51
    %v55 = vadd.f32 %v37, %v53
    %v56 = vsel %vm29, %v15, 0.0
    %v57 = vsel %vm30, %v16, 0.0
    %v58 = vsel %vm31, %v56, 0.0
    %59 = vadd.xlane.f32.xlu0 %v58
    %v60 = vpop.xlane.xlu0 %59
    %v61 = vsel %vm31, %v57, 0.0
    %62 = vadd.xlane.f32.xlu0 %v61
    %v63 = vpop.xlane.xlu0 %62
    %v64 = vsub.f32 %v54, %v60
    %v65 = vsub.f32 %v55, %v63
    %v66 = vmul.f32 %v19, %v64
    %v67 = vmul.f32 %v20, %v65
    %vm68 = vcmask 7168
    %v69 = vsel %vm68, %v66, 0.0
    %v70 = vsel %vm68, %v67, 0.0
    %v71 = vadd.f32 %v69, %v70
    %72 = vadd.xlane.f32.xlu0 %v71
    %v73 = vpop.xlane.xlu0 %72
    %v74 = vrot.slane %v73, 4
    %v75 = vadd.f32 %v73, %v74
    %v76 = vrot.slane %v75, 2
    %v77 = vadd.f32 %v75, %v76
    %v78 = vrot.slane %v77, 1
    %v79 = vadd.f32 %v77, %v78
    %s80 = vtos %v79
    %v81 = vstv %s80
    %82 = vst [vmem:[#allocation2] sm:$0xff] %v81
    // Predicated region
    $region14: #{tpu_custom_call.1} parent=1 // pred_check
      _
    $region15: #{tpu_custom_call.1} parent=1 // pred_check_branch
      %84 = sbr.rel (0) target = $region17
    $region16: #{tpu_custom_call.1} parent=1 // pred_region
      %86 = vsyncadd [#allocation3], 0
      %s88 = sshll.u32 [#allocation2], 4
      %s89 = int_to_ptr.vmem [resolvable:$true] %s88
      %s90 = sshll.u32 %s3, 4
      %s91 = int_to_ptr.hbm [resolvable:$true] %s90
      %93 = dma.vmem_to_hbm [thread:$0]  %s89, 128, %s91, [#allocation3]
    $region17: #{tpu_custom_call.1} parent=1 // pred_fallthru
      _
    // Predicated region
    $region18: #{tpu_custom_call.1} parent=1 // pred_check
      _
    $region19: #{tpu_custom_call.1} parent=1 // pred_check_branch
      %95 = sbr.rel (0) target = $region21
    $region20: #{tpu_custom_call.1} parent=1 // pred_region
      %97 = dma.done [#allocation3], 128
    $region21: #{tpu_custom_call.1} parent=1 // pred_fallthru
      _
    %98 = vsyncpa [#allocation3], 1

</llo_original>
